<compile_context>
chip_gen: v6e
topology: v6e:2x2x1
jax: 0.10.0
libtpu: 0.0.40
codegen_flags: <defaults>
</compile_context>

<pallas_src>
import math
import jax
import jax.numpy as jnp
from jax import lax
from jax.experimental import pallas as pl
from jax.experimental.pallas import tpu as pltpu


# Scoped-VMEM request (safe on v5e/v6e/v7x) and the fraction of it one grid step's
# working set (double-buffered I/O tiles + in-kernel temporaries) may occupy.
_VMEM_LIMIT_BYTES = 32 * 1024 * 1024
_VMEM_BUDGET_BYTES = int(0.6 * _VMEM_LIMIT_BYTES)


def single_attention_add_kernel(x_ref,      # (Bblk, T, D) f32
                                lens_ref,   # (Bblk, 1)    int32
                                lv_ref,     # (Bblk, D)    f32   last_visit
                                wcat_ref,   # (2D, H)      f32   [Wx; Wt]
                                bh_ref,     # (1, H)       f32
                                wa_ref,     # (1, H)       f32   Wa as a row
                                v_ref,      # (Bblk, D)    f32   out
                                a_ref):     # (Bblk, T)    f32   out
    Bblk, T, D = x_ref.shape
    H = wcat_ref.shape[1]

    x = x_ref[...]                                          # (Bblk, T, D)
    lv = lv_ref[...]                                        # (Bblk, D)

    # --- fused MXU call: [x[b,t] | last_visit[b]] @ [Wx; Wt] == x@Wx + lv@Wt ---
    x_flat = x.reshape(Bblk * T, D)
    lv_flat = jnp.broadcast_to(lv[:, None, :], (Bblk, T, D)).reshape(Bblk * T, D)
    xa = jnp.concatenate([x_flat, lv_flat], axis=-1)        # (Bblk*T, 2D)
    h = jnp.tanh(jnp.dot(xa, wcat_ref[...],
                         preferred_element_type=jnp.float32)
                 + bh_ref[...])                             # (Bblk*T, H)
    h = h.reshape(Bblk, T, H)

    # e = h @ Wa as a VPU multiply + lane reduction (Wa passed as a (1, H) row).
    # ba is omitted: a uniform shift of the unmasked logits does not change softmax/v.
    e = jnp.sum(h * wa_ref[...], axis=-1)                   # (Bblk, T)

    # --- masked fill, mask rebuilt in-kernel from sequence lengths (no HBM mask) ---
    t_idx = lax.broadcasted_iota(jnp.int32, (Bblk, T), 1)
    e = jnp.where(t_idx < lens_ref[...], e, jnp.float32(-1e9))

    # --- softmax over time (lane axis), exact divide ---
    e_max = jnp.max(e, axis=-1, keepdims=True)              # (Bblk, 1)
    p = jnp.exp(e - e_max)
    a = p / jnp.sum(p, axis=-1, keepdims=True)              # (Bblk, T)

    # --- weighted sum over time: v[b] = sum_t a[b,t] * x[b,t,:] ---
    v = jnp.sum(a[:, :, None] * x, axis=1)                  # (Bblk, D)

    v_ref[...] = v
    a_ref[...] = a


def _round_up(v, m):
    return (v + m - 1) // m * m


def _block_vmem_bytes(blk, T, D, H):
    """Estimated per-grid-step VMEM working set for batch block `blk` (f32, (8,128)-padded)."""
    def tile(r, c):
        return _round_up(max(r, 1), 8) * _round_up(max(c, 1), 128) * 4
    # pipelined (double-buffered) input/output tiles
    io = 2 * (tile(blk * T, D)      # x
              + tile(blk, 1)        # lens
              + tile(blk, D)        # last_visit
              + tile(blk, D)        # v out
              + tile(blk, T))       # a out
    weights = 2 * (tile(2 * D, H) + 2 * tile(1, H))
    # in-kernel temporaries: xa, h, e/p/a, and the a*x product feeding v
    temps = (tile(blk * T, 2 * D) + tile(blk * T, H)
             + 3 * tile(blk, T) + tile(blk * T, D))
    return io + weights + temps


def _choose_block_b(B, T, D, H, budget_bytes=_VMEM_BUDGET_BYTES):
    """Largest batch block that (a) divides B, (b) satisfies the sublane rule
    (block == B or block % 8 == 0), (c) fits the VMEM working-set budget, and
    (d) when possible keeps >= 2 grid steps (so v7x's two TensorCores both work)."""
    valid = [blk for blk in range(1, B + 1)
             if B % blk == 0 and (blk == B or blk % 8 == 0)]
    fitting = [blk for blk in valid if _block_vmem_bytes(blk, T, D, H) <= budget_bytes]
    if not fitting:
        return min(valid)
    multi_step = [blk for blk in fitting if B // blk >= 2]
    return max(multi_step) if multi_step else max(fitting)


def single_attention_add(x, mask, params, block_b=None):
    """x: (B, T, D) f32, mask: (B, T) {0,1} contiguous-prefix. Returns (v (B, D), a (B, T))."""
    B, T, D = x.shape
    Wt, Wx, bh, Wa, ba = params
    H = Wt.shape[1]

    # get_last_visit + sequence lengths resolved in the wrapper (cheap XLA gather).
    lens = jnp.sum(mask, axis=1).astype(jnp.int32)                      # (B,)
    last_idx = jnp.maximum(lens - 1, 0)                                 # clamp empty rows
    last_visit = x[jnp.arange(B), last_idx].astype(jnp.float32)         # (B, D)
    lens2 = lens[:, None]                                               # (B, 1)

    Wcat = jnp.concatenate([Wx, Wt], axis=0).astype(jnp.float32)        # (2D, H)
    bh2 = bh.reshape(1, H).astype(jnp.float32)
    wa_row = Wa.reshape(1, H).astype(jnp.float32)
    # ba is intentionally not passed to the kernel (softmax shift-invariance).

    if block_b is None:
        block_b = _choose_block_b(B, T, D, H)
    assert B % block_b == 0, (B, block_b)

    v, a = pl.pallas_call(
        single_attention_add_kernel,
        out_shape=(
            jax.ShapeDtypeStruct((B, D), jnp.float32),
            jax.ShapeDtypeStruct((B, T), jnp.float32),
        ),
        grid_spec=pltpu.PrefetchScalarGridSpec(
            num_scalar_prefetch=0,
            grid=(B // block_b,),
            in_specs=[
                pl.BlockSpec((block_b, T, D), lambda b: (b, 0, 0)),   # x
                pl.BlockSpec((block_b, 1), lambda b: (b, 0)),         # lens
                pl.BlockSpec((block_b, D), lambda b: (b, 0)),         # last_visit
                pl.BlockSpec((2 * D, H), lambda b: (0, 0)),           # [Wx; Wt]
                pl.BlockSpec((1, H), lambda b: (0, 0)),               # bh
                pl.BlockSpec((1, H), lambda b: (0, 0)),               # Wa row
            ],
            out_specs=[
                pl.BlockSpec((block_b, D), lambda b: (b, 0)),         # v
                pl.BlockSpec((block_b, T), lambda b: (b, 0)),         # a
            ],
        ),
        compiler_params=pltpu.CompilerParams(
            dimension_semantics=("parallel",),
            vmem_limit_bytes=_VMEM_LIMIT_BYTES,
        ),
    )(x.astype(jnp.float32), lens2, last_visit, Wcat, bh2, wa_row)

    return v, a


def reference_add(x, mask, params):
    """Pure-JAX reference mirroring the PyTorch forward ('add', time_aware=False)."""
    Wt, Wx, bh, Wa, ba = params
    B, T, D = x.shape
    last_idx = jnp.sum(mask, axis=1).astype(jnp.int32) - 1
    last_visit = x[jnp.arange(B), last_idx]                    # (B, D)
    q = (last_visit @ Wt)[:, None, :]                          # (B, 1, H)
    k = x @ Wx                                                 # (B, T, H)
    h = jnp.tanh(q + k + bh)                                   # (B, T, H)
    e = (h @ Wa).reshape(B, T) + ba                            # (B, T)
    e = jnp.where(mask == 0, -1e9, e)
    a = jax.nn.softmax(e, axis=1)
    v = jnp.einsum("bt,btd->bd", a, x)
    return v, a


def init_params(key, input_dim, hidden_dim):
    """Deterministic kaiming-uniform-style init (shapes from SingleAttention.__init__, 'add')."""
    k1, k2, k3 = jax.random.split(key, 3)
    bound_in = 1.0 / math.sqrt(input_dim)
    bound_h = 1.0 / math.sqrt(hidden_dim)
    Wx = jax.random.uniform(k1, (input_dim, hidden_dim), jnp.float32, -bound_in, bound_in)
    Wt = jax.random.uniform(k2, (input_dim, hidden_dim), jnp.float32, -bound_in, bound_in)
    bh = jnp.zeros((hidden_dim,), jnp.float32)
    Wa = jax.random.uniform(k3, (hidden_dim, 1), jnp.float32, -bound_h, bound_h)
    ba = jnp.zeros((1,), jnp.float32)
    return (Wt, Wx, bh, Wa, ba)


if __name__ == "__main__":
    B, T, D, H = 2, 8, 16, 32

    key = jax.random.PRNGKey(0)
    kx, kp = jax.random.split(key)
    x = jax.random.normal(kx, (B, T, D), jnp.float32)

    # mask: contiguous valid prefix of each sequence (1 = valid visit)
    lengths = jnp.array([6, 4], dtype=jnp.int32)
    mask = (jnp.arange(T)[None, :] < lengths[:, None]).astype(jnp.int32)

    params = init_params(kp, D, H)

    v, a = single_attention_add(x, mask, params)
    jax.block_until_ready((v, a))

    v_ref, a_ref = reference_add(x, mask, params)
    assert jnp.allclose(v, v_ref, atol=1e-4, rtol=1e-4), "v mismatch"
    assert jnp.allclose(a, a_ref, atol=1e-4, rtol=1e-4), "a mismatch"

    print("KERNEL_OK")
</pallas_src>

<mosaic_0001>
module attributes {stable_mosaic.version = 11 : i64} {
  func.func @single_attention_add_kernel(%arg0: i32, %arg1: memref<2x8x16xf32, #tpu.memory_space<vmem>>, %arg2: memref<2x1xi32, #tpu.memory_space<vmem>>, %arg3: memref<2x16xf32, #tpu.memory_space<vmem>>, %arg4: memref<32x32xf32, #tpu.memory_space<vmem>>, %arg5: memref<1x32xf32, #tpu.memory_space<vmem>>, %arg6: memref<1x32xf32, #tpu.memory_space<vmem>>, %arg7: memref<2x16xf32, #tpu.memory_space<vmem>>, %arg8: memref<2x8xf32, #tpu.memory_space<vmem>>) attributes {dimension_semantics = [#tpu.dimension_semantics<parallel>], iteration_bounds = array<i64: 1>, scalar_prefetch = 0 : i64, scratch_operands = 0 : i64, tpu.core_type = #tpu.core_type<tc>, window_params = [{transform_indices = @transform_0, window_bounds = array<i64: 2, 8, 16>}, {transform_indices = @transform_1, window_bounds = array<i64: 2, 1>}, {transform_indices = @transform_2, window_bounds = array<i64: 2, 16>}, {pipeline_mode = #tpu.pipeline_mode<synchronous>, transform_indices = @transform_3, window_bounds = array<i64: 32, 32>}, {pipeline_mode = #tpu.pipeline_mode<synchronous>, transform_indices = @transform_4, window_bounds = array<i64: 1, 32>}, {pipeline_mode = #tpu.pipeline_mode<synchronous>, transform_indices = @transform_5, window_bounds = array<i64: 1, 32>}, {transform_indices = @transform_6, window_bounds = array<i64: 2, 16>}, {transform_indices = @transform_7, window_bounds = array<i64: 2, 8>}]} {
    %c0 = arith.constant 0 : index
    %c0_0 = arith.constant 0 : index
    %c0_1 = arith.constant 0 : index
    %0 = vector.load %arg1[%c0, %c0_0, %c0_1] : memref<2x8x16xf32, #tpu.memory_space<vmem>>, vector<2x8x16xf32>
    %c0_2 = arith.constant 0 : index
    %c0_3 = arith.constant 0 : index
    %1 = vector.load %arg3[%c0_2, %c0_3] : memref<2x16xf32, #tpu.memory_space<vmem>>, vector<2x16xf32>
    %2 = vector.shape_cast %0 : vector<2x8x16xf32> to vector<16x16xf32>
    %3 = vector.shape_cast %1 : vector<2x16xf32> to vector<2x1x16xf32>
    %4 = vector.shape_cast %3 : vector<2x1x16xf32> to vector<2x1x16xf32>
    %5 = vector.broadcast %4 : vector<2x1x16xf32> to vector<2x8x16xf32>
    %6 = vector.shape_cast %5 : vector<2x8x16xf32> to vector<16x16xf32>
    %7 = tpu.concatenate %2, %6 in 1 : vector<16x16xf32>, vector<16x16xf32> -> vector<16x32xf32>
    %c0_4 = arith.constant 0 : index
    %c0_5 = arith.constant 0 : index
    %8 = vector.load %arg4[%c0_4, %c0_5] : memref<32x32xf32, #tpu.memory_space<vmem>>, vector<32x32xf32>
    %cst = arith.constant dense<0.000000e+00> : vector<16x32xf32>
    %9 = tpu.matmul %7, %8, %cst {dimension_numbers = #tpu.dot_dimension_numbers<[1], [0], [0], [1], [0, 0, 1, 1], [], []>} : vector<16x32xf32>, vector<32x32xf32>, vector<16x32xf32> -> vector<16x32xf32>
    %c0_6 = arith.constant 0 : index
    %c0_7 = arith.constant 0 : index
    %10 = vector.load %arg5[%c0_6, %c0_7] : memref<1x32xf32, #tpu.memory_space<vmem>>, vector<1x32xf32>
    %11 = vector.broadcast %10 : vector<1x32xf32> to vector<16x32xf32>
    %12 = arith.addf %9, %11 : vector<16x32xf32>
    %13 = math.tanh %12 : vector<16x32xf32>
    %14 = vector.shape_cast %13 : vector<16x32xf32> to vector<2x8x32xf32>
    %c0_8 = arith.constant 0 : index
    %c0_9 = arith.constant 0 : index
    %15 = vector.load %arg6[%c0_8, %c0_9] : memref<1x32xf32, #tpu.memory_space<vmem>>, vector<1x32xf32>
    %16 = vector.shape_cast %15 : vector<1x32xf32> to vector<1x1x32xf32>
    %17 = vector.broadcast %16 : vector<1x1x32xf32> to vector<2x8x32xf32>
    %18 = arith.mulf %14, %17 : vector<2x8x32xf32>
    %cst_10 = arith.constant dense<0.000000e+00> : vector<2x8xf32>
    %19 = vector.multi_reduction <add>, %18, %cst_10 [2] : vector<2x8x32xf32> to vector<2x8xf32>
    %20 = tpu.iota {dimensions = array<i32: 1>} : vector<2x8xi32>
    %c0_11 = arith.constant 0 : index
    %c0_12 = arith.constant 0 : index
    %21 = vector.load %arg2[%c0_11, %c0_12] : memref<2x1xi32, #tpu.memory_space<vmem>>, vector<2x1xi32>
    %22 = vector.broadcast %21 : vector<2x1xi32> to vector<2x8xi32>
    %23 = arith.cmpi slt, %20, %22 : vector<2x8xi32>
    %cst_13 = arith.constant -1.000000e+09 : f32
    %24 = vector.broadcast %cst_13 : f32 to vector<2x8xf32>
    %25 = arith.select %23, %19, %24 : vector<2x8xi1>, vector<2x8xf32>
    %cst_14 = arith.constant dense<0xFF800000> : vector<2xf32>
    %26 = vector.multi_reduction <maximumf>, %25, %cst_14 [1] : vector<2x8xf32> to vector<2xf32>
    %27 = vector.shape_cast %26 : vector<2xf32> to vector<2x1xf32>
    %28 = vector.broadcast %27 : vector<2x1xf32> to vector<2x8xf32>
    %29 = arith.subf %25, %28 : vector<2x8xf32>
    %30 = math.exp %29 : vector<2x8xf32>
    %cst_15 = arith.constant dense<0.000000e+00> : vector<2xf32>
    %31 = vector.multi_reduction <add>, %30, %cst_15 [1] : vector<2x8xf32> to vector<2xf32>
    %32 = vector.shape_cast %31 : vector<2xf32> to vector<2x1xf32>
    %33 = vector.broadcast %32 : vector<2x1xf32> to vector<2x8xf32>
    %34 = arith.divf %30, %33 : vector<2x8xf32>
    %35 = vector.shape_cast %34 : vector<2x8xf32> to vector<2x8x1xf32>
    %36 = vector.broadcast %35 : vector<2x8x1xf32> to vector<2x8x16xf32>
    %37 = arith.mulf %36, %0 : vector<2x8x16xf32>
    %cst_16 = arith.constant dense<0.000000e+00> : vector<2x16xf32>
    %38 = vector.multi_reduction <add>, %37, %cst_16 [1] : vector<2x8x16xf32> to vector<2x16xf32>
    %c0_17 = arith.constant 0 : index
    %c0_18 = arith.constant 0 : index
    %39 = vector.load %arg7[%c0_17, %c0_18] : memref<2x16xf32, #tpu.memory_space<vmem>>, vector<2x16xf32>
    tpu.vector_store %arg7[%c0_17, %c0_18], %38 {strides = array<i32>} : memref<2x16xf32, #tpu.memory_space<vmem>>, vector<2x16xf32>,
    %c0_19 = arith.constant 0 : index
    %c0_20 = arith.constant 0 : index
    %40 = vector.load %arg8[%c0_19, %c0_20] : memref<2x8xf32, #tpu.memory_space<vmem>>, vector<2x8xf32>
    tpu.vector_store %arg8[%c0_19, %c0_20], %34 {strides = array<i32>} : memref<2x8xf32, #tpu.memory_space<vmem>>, vector<2x8xf32>,
    return
  }
  func.func @transform_0(%arg0: i32) -> (i32, i32, i32) {
    %c0_i32 = arith.constant 0 : i32
    %c0_i32_0 = arith.constant 0 : i32
    %c0_i32_1 = arith.constant 0 : i32
    return %arg0, %c0_i32, %c0_i32_0 : i32, i32, i32
  }
  func.func @transform_1(%arg0: i32) -> (i32, i32) {
    %c0_i32 = arith.constant 0 : i32
    %c0_i32_0 = arith.constant 0 : i32
    return %arg0, %c0_i32 : i32, i32
  }
  func.func @transform_2(%arg0: i32) -> (i32, i32) {
    %c0_i32 = arith.constant 0 : i32
    %c0_i32_0 = arith.constant 0 : i32
    return %arg0, %c0_i32 : i32, i32
  }
  func.func @transform_3(%arg0: i32) -> (i32, i32) {
    %c0_i32 = arith.constant 0 : i32
    %c0_i32_0 = arith.constant 0 : i32
    %c0_i32_1 = arith.constant 0 : i32
    return %c0_i32, %c0_i32_0 : i32, i32
  }
  func.func @transform_4(%arg0: i32) -> (i32, i32) {
    %c0_i32 = arith.constant 0 : i32
    %c0_i32_0 = arith.constant 0 : i32
    %c0_i32_1 = arith.constant 0 : i32
    return %c0_i32, %c0_i32_0 : i32, i32
  }
  func.func @transform_5(%arg0: i32) -> (i32, i32) {
    %c0_i32 = arith.constant 0 : i32
    %c0_i32_0 = arith.constant 0 : i32
    %c0_i32_1 = arith.constant 0 : i32
    return %c0_i32, %c0_i32_0 : i32, i32
  }
  func.func @transform_6(%arg0: i32) -> (i32, i32) {
    %c0_i32 = arith.constant 0 : i32
    %c0_i32_0 = arith.constant 0 : i32
    return %arg0, %c0_i32 : i32, i32
  }
  func.func @transform_7(%arg0: i32) -> (i32, i32) {
    %c0_i32 = arith.constant 0 : i32
    %c0_i32_0 = arith.constant 0 : i32
    return %arg0, %c0_i32 : i32, i32
  }
}

</mosaic_0001>

<llo_original>
// kernel: tpu_custom_call.1
$region0: #{tpu_custom_call.1}
  #allocation0 [shape = 'u32[]', space=smem, size = 0x4, offset = 0x4, fixed_abs, tag = 'smem constant byte address 0x4 - core index']
  #allocation1 [shape = 'u32[144,128]{1,0:T(1,128)}', space=vmem, size = 0x12000, scoped, tag = 'internal scratch']
  %s0 = inlined_call_operand.hbm [shape: f32[2,8,16], index: 0, kind: input, shape index: {}]
  %s1 = inlined_call_operand.vmem [shape: s32[2,1], index: 1, kind: input, shape index: {}]
  %s2 = inlined_call_operand.vmem [shape: f32[2,16], index: 2, kind: input, shape index: {}]
  %s3 = inlined_call_operand.hbm [shape: f32[32,32], index: 3, kind: input, shape index: {}]
  %s4 = inlined_call_operand.vmem [shape: f32[1,32], index: 4, kind: input, shape index: {}]
  %s5 = inlined_call_operand.vmem [shape: f32[1,32], index: 5, kind: input, shape index: {}]
  %s6 = inlined_call_operand.hbm [shape: f32[2,16], index: 6, kind: output, shape index: {0}]
  %s7 = inlined_call_operand.hbm [shape: f32[2,8], index: 7, kind: output, shape index: {1}]
  %8 = xla_tuple %s6, %s7
  %s9 = sld [smem:[#allocation0]]
  $region50: #{tpu_custom_call.1} parent=0
    _
  %s11 = ssub.s32 1, %s9
  %s12 = scalar_select 0, %s11, %s9
  $region1: #{tpu_custom_call.1} parent=0
    #allocation2 [shape = 'u8[8192]{0}', space=vmem, size = 0x2000, scoped, tag = 'input window, operand 0, single buffered']
    #allocation3 [shape = 's32[1]{0}', space=sflag, size = 0x4, scoped, tag = 'scoped memory for tpu_custom_call.1']
    #allocation4 [shape = 's32[1]{0}', space=sflag, size = 0x4, scoped, tag = 'scoped memory for tpu_custom_call.1']
    #allocation5 [shape = 'u8[16384]{0}', space=vmem, size = 0x4000, scoped, tag = 'input window, operand 3, single buffered']
    #allocation6 [shape = 's32[1]{0}', space=sflag, size = 0x4, scoped, tag = 'scoped memory for tpu_custom_call.1']
    #allocation7 [shape = 'u8[1024]{0}', space=vmem, size = 0x400, scoped, tag = 'output window, operand 0, single buffered']
    #allocation8 [shape = 'u8[1024]{0}', space=vmem, size = 0x400, scoped, tag = 'output window, operand 1, single buffered']
    #allocation9 [shape = 's32[1]{0}', space=sflag, size = 0x4, scoped, tag = 'scoped memory for tpu_custom_call.1']
    %13 = vsyncpa [#allocation3], 0
    %14 = vsyncpa [#allocation6], 0
    %15 = vsyncpa [#allocation4], 0
    %16 = vsyncpa [#allocation9], 0
    // Predicated region
    $region2: #{tpu_custom_call.1} parent=1 // pred_check
      _
    $region3: #{tpu_custom_call.1} parent=1 // pred_check_branch
      %18 = sbr.rel (0) target = $region5
    $region4: #{tpu_custom_call.1} parent=1 // pred_region
      %s20 = ssub.s32 256, 256
      %21 = vsyncadd [#allocation3], %s20
      %s22 = sshll.u32 [#allocation2], 4
      %s23 = int_to_ptr.vmem [resolvable:$true] %s22
      %28 = dma.hbm_to_vmem [thread:$0]  %s0, 256, %s23, [#allocation3], 128, 128, 8
    $region5: #{tpu_custom_call.1} parent=1 // pred_fallthru
      _
    // Predicated region
    $region6: #{tpu_custom_call.1} parent=1 // pred_check
      _
    $region7: #{tpu_custom_call.1} parent=1 // pred_check_branch
      %30 = sbr.rel (0) target = $region9
    $region8: #{tpu_custom_call.1} parent=1 // pred_region
      _
    $region9: #{tpu_custom_call.1} parent=1 // pred_fallthru
      _
    // Predicated region
    $region10: #{tpu_custom_call.1} parent=1 // pred_check
      _
    $region11: #{tpu_custom_call.1} parent=1 // pred_check_branch
      %32 = sbr.rel (0) target = $region13
    $region12: #{tpu_custom_call.1} parent=1 // pred_region
      _
    $region13: #{tpu_custom_call.1} parent=1 // pred_fallthru
      _
    // Predicated region
    $region14: #{tpu_custom_call.1} parent=1 // pred_check
      _
    $region15: #{tpu_custom_call.1} parent=1 // pred_check_branch
      %34 = sbr.rel (0) target = $region17
    $region16: #{tpu_custom_call.1} parent=1 // pred_region
      %s36 = ssub.s32 512, 512
      %37 = vsyncadd [#allocation6], %s36
      %s38 = sshll.u32 [#allocation5], 4
      %s39 = int_to_ptr.vmem [resolvable:$true] %s38
      %44 = dma.hbm_to_vmem [thread:$0]  %s3, 512, %s39, [#allocation6], 128, 128, 8
    $region17: #{tpu_custom_call.1} parent=1 // pred_fallthru
      _
    // Predicated region
    $region18: #{tpu_custom_call.1} parent=1 // pred_check
      _
    $region19: #{tpu_custom_call.1} parent=1 // pred_check_branch
      %46 = sbr.rel (0) target = $region21
    $region20: #{tpu_custom_call.1} parent=1 // pred_region
      _
    $region21: #{tpu_custom_call.1} parent=1 // pred_fallthru
      _
    // Predicated region
    $region22: #{tpu_custom_call.1} parent=1 // pred_check
      _
    $region23: #{tpu_custom_call.1} parent=1 // pred_check_branch
      %48 = sbr.rel (0) target = $region25
    $region24: #{tpu_custom_call.1} parent=1 // pred_region
      _
    $region25: #{tpu_custom_call.1} parent=1 // pred_fallthru
      _
    // Predicated region
    $region26: #{tpu_custom_call.1} parent=1 // pred_check
      _
    $region27: #{tpu_custom_call.1} parent=1 // pred_check_branch
      %50 = sbr.rel (0) target = $region29
    $region28: #{tpu_custom_call.1} parent=1 // pred_region
      %51 = dma.done [#allocation3], 256
    $region29: #{tpu_custom_call.1} parent=1 // pred_fallthru
      _
    // Predicated region
    $region30: #{tpu_custom_call.1} parent=1 // pred_check
      _
    $region31: #{tpu_custom_call.1} parent=1 // pred_check_branch
      %53 = sbr.rel (0) target = $region33
    $region32: #{tpu_custom_call.1} parent=1 // pred_region
      %54 = dma.done [#allocation6], 512
    $region33: #{tpu_custom_call.1} parent=1 // pred_fallthru
      _
    %v55 = vld [vmem:[#allocation2] sm:$0xff]
    %v56 = vld [vmem:[#allocation2 + $0x8] sm:$0xff]
    %v57 = vld [vmem:[%s2] sm:$0x3]
    %v60 = vunpack.c.l.s4 1966171168
    %v61 = vunpack.c.0.s8 %v60
    %v62 = vlaneseq
    %v63 = vshrl.u32 %v62, 7
    %v64 = vsub.s32 %v61, %v63
    %v65 = vrot.slane %v57, %v64
    %v66 = vcombine.high %v65, %v65
    %v68 = vunpack.c.l.s4 1966171168
    %v69 = vunpack.c.0.s8 %v68
    %v70 = vlaneseq
    %v71 = vshrl.u32 %v70, 7
    %v72 = vsub.s32 %v69, %v71
    %v73 = vrot.slane %v65, %v72
    %v75 = vunpack.c.l.s4 1966171168
    %v76 = vunpack.c.0.s8 %v75
    %v77 = vlaneseq
    %v78 = vshrl.u32 %v77, 7
    %v79 = vsub.s32 %v76, %v78
    %v80 = vrot.slane %v66, %v79
    %v81 = vlaneseq
    %v82 = vshrl.u32 %v81, 7
    %v83 = vsub.s32 0, %v82
    %v84 = vrot.slane %v73, %v83
    %v85 = vlaneseq
    %v86 = vshrl.u32 %v85, 7
    %v87 = vsub.s32 0, %v86
    %v88 = vrot.slane %v80, %v87
    %89 = vrot.lane.b32.xlu0 %v84, 16
    %v90 = vpop.permute.xlu0 %89
    %91 = vrot.lane.b32.xlu0 %v88, 16
    %v92 = vpop.permute.xlu0 %91
    %vm95 = vcmask 130048
    %v96 = vsel %vm95, %v55, %v90
    %v97 = vsel %vm95, %v56, %v92
    %v98 = vld [vmem:[#allocation5] sm:$0xff]
    %v99 = vld [vmem:[#allocation5 + $0x8] sm:$0xff]
    %v100 = vld [vmem:[#allocation5 + $0x10] sm:$0xff]
    %v101 = vld [vmem:[#allocation5 + $0x18] sm:$0xff]
    %v102 = vld [vmem:[%s4] sm:$0x1]
    %v104 = vlaneseq
    %v105 = vshrl.u32 %v104, 7
    %v106 = vsub.s32 0, %v105
    %v107 = vrot.slane %v102, %v106
    %vm109 = vcmask 261120
    %v111 = vsel %vm109, %v96, 0
    %v114 = vsel %vm109, %v97, 0
    %116 = vmatprep.subr.mxu0 0.0
    %117 = vmatpush1.msra.mxu0 0.0
    %118 = vmatprep.subr.mxu0 0.0
    %119 = vmatpush1.msra.mxu0 0.0
    %120 = vmatprep.subr.mxu0 0.0
    %121 = vmatpush1.msra.mxu0 0.0
    %122 = vmatprep.subr.mxu0 0.0
    %123 = vmatpush1.msra.mxu0 0.0
    %124 = vmatprep.subr.mxu0 0.0
    %125 = vmatpush1.msra.mxu0 0.0
    %126 = vmatprep.subr.mxu0 0.0
    %127 = vmatpush1.msra.mxu0 0.0
    %128 = vmatprep.subr.mxu0 0.0
    %129 = vmatpush1.msra.mxu0 0.0
    %130 = vmatprep.subr.mxu0 0.0
    %131 = vmatpush1.msra.mxu0 0.0
    %132 = vmatprep.subr.mxu0 0.0
    %133 = vmatpush1.msra.mxu0 0.0
    %134 = vmatprep.subr.mxu0 0.0
    %135 = vmatpush1.msra.mxu0 0.0
    %136 = vmatprep.subr.mxu0 0.0
    %137 = vmatpush1.msra.mxu0 0.0
    %138 = vmatprep.subr.mxu0 0.0
    %139 = vmatpush1.msra.mxu0 0.0
    %140 = vmatprep.subr.mxu0 0.0
    %141 = vmatpush1.msra.mxu0 %v101
    %142 = vmatprep.subr.mxu0 0.0
    %143 = vmatpush1.msra.mxu0 %v100
    %144 = vmatprep.subr.mxu0 0.0
    %145 = vmatpush1.msra.mxu0 %v99
    %146 = vmatprep.subr.mxu0 0.0
    %147 = vmatpush1.msra.mxu0 %v98
    %148 = vmatprep.subr.mxu0 0.0
    %149 = vmatpush2.msra.mxu0 0.0
    %150 = vmatprep.subr.mxu0 0.0
    %151 = vmatpush2.msra.mxu0 0.0
    %152 = vmatprep.subr.mxu0 0.0
    %153 = vmatpush2.msra.mxu0 0.0
    %154 = vmatprep.subr.mxu0 0.0
    %155 = vmatpush2.msra.mxu0 0.0
    %156 = vmatprep.subr.mxu0 0.0
    %157 = vmatpush2.msra.mxu0 0.0
    %158 = vmatprep.subr.mxu0 0.0
    %159 = vmatpush2.msra.mxu0 0.0
    %160 = vmatprep.subr.mxu0 0.0
    %161 = vmatpush2.msra.mxu0 0.0
    %162 = vmatprep.subr.mxu0 0.0
    %163 = vmatpush2.msra.mxu0 0.0
    %164 = vmatprep.subr.mxu0 0.0
    %165 = vmatpush2.msra.mxu0 0.0
    %166 = vmatprep.subr.mxu0 0.0
    %167 = vmatpush2.msra.mxu0 0.0
    %168 = vmatprep.subr.mxu0 0.0
    %169 = vmatpush2.msra.mxu0 0.0
    %170 = vmatprep.subr.mxu0 0.0
    %171 = vmatpush2.msra.mxu0 0.0
    %172 = vmatprep.subr.mxu0 0.0
    %173 = vmatpush2.msra.mxu0 0.0
    %174 = vmatprep.subr.mxu0 0.0
    %175 = vmatpush2.msra.mxu0 0.0
    %176 = vmatprep.subr.mxu0 0.0
    %177 = vmatpush2.msra.mxu0 0.0
    %178 = vmatprep.subr.mxu0 0.0
    %179 = vmatpush2.msra.mxu0 0.0
    %180 = vmatprep.mubr.f32.mxu0 0.0
    %181 = vmatmul.mubr.f32.gmra.mxu0 %v111
    %v182 = vpop.f32.mrf.mxu0
    %v183 = vadd.f32 %v107, %v182
    %v184 = vpop.f32.mrf.mxu0
    %185 = vmatprep.mubr.f32.mxu0 0.0
    %186 = vmatmul.mubr.f32.gmra.mxu0 %v114
    %v187 = vpop.f32.mrf.mxu0
    %v188 = vadd.f32 %v107, %v187
    %v189 = vpop.f32.mrf.mxu0
    %190 = vdwg.mxu0
    %v191 = vtanh.pop %v183
    %v192 = vtanh.pop %v188
    %v193 = vld [vmem:[%s5] sm:$0x1]
    %v195 = vlaneseq
    %v196 = vshrl.u32 %v195, 7
    %v197 = vsub.s32 0, %v196
    %v198 = vrot.slane %v193, %v197
    %v200 = vmul.f32 %v191, %v198
    %v201 = vmul.f32 %v192, %v198
    %v202 = vsel %vm109, %v200, 0.0
    %203 = vadd.xlane.f32.xlu0 %v202
    %v204 = vpop.xlane.xlu0 %203
    %v205 = vsel %vm109, %v201, 0.0
    %206 = vadd.xlane.f32.xlu0 %v205
    %v207 = vpop.xlane.xlu0 %206
    %v208 = vlaneseq
    %v209 = vand.u32 %v208, 127
    %v210 = vld [vmem:[%s1] sm:$0x3]
    %211 = vset.pattern.permute.xlu0 0
    %212 = vperm.xlu0 %211, %v210
    %v213 = vpop.permute.xlu0 %212
    %vm214 = vcmp.lt.s32.totalorder %v209, %v213
    %v217 = vlaneseq
    %v218 = vshrl.u32 %v217, 7
    %v219 = vsub.s32 %v209, %v218
    %v220 = vrot.slane %v204, %v219
    %v221 = vlaneseq
    %v222 = vshrl.u32 %v221, 7
    %v223 = vsub.s32 %v209, %v222
    %v224 = vrot.slane %v207, %v223
    %vm225 = vcmask 1041409
    %v226 = vsel %vm225, %v224, %v220
    %v228 = vsel %vm214, %v226, -1e+09
    %vm229 = vcmask 58368
    %v230 = vsel %vm229, %v228, -inf
    %231 = vmax.xlane.f32.xlu0 %v230
    %v232 = vpop.xlane.xlu0 %231
    %v233 = vsub.f32 %v228, %v232
    %v234 = vmul.f32 %v233, 1.442695
    %v235 = vpow.pop %v234
    %v236 = vsel %vm229, %v235, 0.0
    %237 = vadd.xlane.f32.xlu0 %v236
    %v238 = vpop.xlane.xlu0 %237
    %v239 = vrcp.pop %v238
    %v240 = vmul.f32 %v235, %v239
    %v241 = vlaneseq
    %v242 = vshrl.u32 %v241, 7
    %v243 = vsub.s32 0, %v242
    %v244 = vrot.slane %v240, %v243
    %246 = vbcast.lane.b32.xlu0 %v244, 256
    %v247 = vpop.permute.xlu0 %246
    %v248 = vlaneseq
    %v249 = vshrl.u32 %v248, 7
    %v250 = vsub.s32 1, %v249
    %v251 = vrot.slane %v240, %v250
    %253 = vbcast.lane.b32.xlu0 %v251, 256
    %v254 = vpop.permute.xlu0 %253
    %v255 = vmul.f32 %v247, %v55
    %v256 = vmul.f32 %v254, %v56
    %v257 = vsel %vm95, %v255, 0.0
    %v258 = vrot.slane %v257, 4
    %v259 = vadd.f32 %v257, %v258
    %v260 = vrot.slane %v259, 2
    %v261 = vadd.f32 %v259, %v260
    %v262 = vrot.slane %v261, 1
    %v263 = vadd.f32 %v261, %v262
    %v264 = vsel %vm95, %v256, 0.0
    %v265 = vrot.slane %v264, 4
    %v266 = vadd.f32 %v264, %v265
    %v267 = vrot.slane %v266, 2
    %v268 = vadd.f32 %v266, %v267
    %v269 = vrot.slane %v268, 1
    %v270 = vadd.f32 %v268, %v269
    %v273 = vsel %vm225, %v270, %v263
    %vm275 = vcmask 123904
    %276 = vst.msk [vmem:[#allocation7] sm:$0x3] %vm275, %v273
    %277 = vst.msk [vmem:[#allocation8] sm:$0x3] %vm229, %v240
    // Predicated region
    $region34: #{tpu_custom_call.1} parent=1 // pred_check
      _
    $region35: #{tpu_custom_call.1} parent=1 // pred_check_branch
      %279 = sbr.rel (0) target = $region37
    $region36: #{tpu_custom_call.1} parent=1 // pred_region
      %s281 = ssub.s32 32, 32
      %282 = vsyncadd [#allocation4], %s281
      %s284 = sshll.u32 [#allocation7], 4
      %s285 = int_to_ptr.vmem [resolvable:$true] %s284
      %287 = dma.vmem_to_hbm [thread:$0]  %s285, 32, %s6, [#allocation4]
    $region37: #{tpu_custom_call.1} parent=1 // pred_fallthru
      _
    // Predicated region
    $region38: #{tpu_custom_call.1} parent=1 // pred_check
      _
    $region39: #{tpu_custom_call.1} parent=1 // pred_check_branch
      %289 = sbr.rel (0) target = $region41
    $region40: #{tpu_custom_call.1} parent=1 // pred_region
      %s291 = ssub.s32 32, 32
      %292 = vsyncadd [#allocation9], %s291
      %s294 = sshll.u32 [#allocation8], 4
      %s295 = int_to_ptr.vmem [resolvable:$true] %s294
      %297 = dma.vmem_to_hbm [thread:$0]  %s295, 32, %s7, [#allocation9]
    $region41: #{tpu_custom_call.1} parent=1 // pred_fallthru
      _
    // Predicated region
    $region42: #{tpu_custom_call.1} parent=1 // pred_check
      _
    $region43: #{tpu_custom_call.1} parent=1 // pred_check_branch
      %299 = sbr.rel (0) target = $region45
    $region44: #{tpu_custom_call.1} parent=1 // pred_region
      %300 = dma.done [#allocation4], 32
    $region45: #{tpu_custom_call.1} parent=1 // pred_fallthru
      _
    // Predicated region
    $region46: #{tpu_custom_call.1} parent=1 // pred_check
      _
    $region47: #{tpu_custom_call.1} parent=1 // pred_check_branch
      %302 = sbr.rel (0) target = $region49
    $region48: #{tpu_custom_call.1} parent=1 // pred_region
      %303 = dma.done [#allocation9], 32
    $region49: #{tpu_custom_call.1} parent=1 // pred_fallthru
      _
    %304 = vsyncpa [#allocation3], 1
    %305 = vsyncpa [#allocation6], 1
    %306 = vsyncpa [#allocation4], 1
    %307 = vsyncpa [#allocation9], 1

</llo_original>
